<compile_context>
chip_gen: v6e
topology: v6e:2x2x1
jax: 0.10.0
libtpu: 0.0.40
codegen_flags: <defaults>
</compile_context>

<pallas_src>
import functools

import jax
import jax.numpy as jnp
from jax.experimental import pallas as pl
from jax.experimental.pallas import tpu as pltpu

# ----------------------------- configuration -------------------------------
N        = 2      # batch
IN_CH    = 4
OUT_CH   = 8      # multiple of IN_CH (groups=in_ch residual conv)
KSIZE    = 3
DILATION = 2
PADDING  = 0      # module default
L_IN     = 32
L_OUT    = L_IN + 2 * PADDING - DILATION * (KSIZE - 1)   # = 28
COND_DIM = 32
EPS      = 1e-5   # BatchNorm1d eps
LANE     = 128    # per-batch length axis padded to one full lane tile


# ------------------------------- kernel ------------------------------------
def _tcn_block_kernel(xt_ref, pT_ref, w_ref, wa_ref, par_ref, o_ref,
                      conv_ref, s1_ref, s2_ref, *,
                      out_ch, n, l_out, eps):
    phase = pl.program_id(0)
    b = pl.program_id(1)

    # ---------- phase 0: stacked conv+residual matmul, BN statistics -------
    @pl.when(phase == 0)
    def _():
        @pl.when(b == 0)
        def _():
            s1_ref[...] = jnp.zeros_like(s1_ref)
            s2_ref[...] = jnp.zeros_like(s2_ref)

        # One MXU matmul: rows [0, out_ch) = dilated conv, rows
        # [out_ch, 2*out_ch) = grouped 1x1 residual at the centre-crop tap.
        # Padded lanes (>= l_out) of xt are zero, so they contribute nothing.
        y = jnp.dot(w_ref[...], xt_ref[...],
                    preferred_element_type=jnp.float32)       # (2*out_ch, LANE)
        conv_ref[b] = y

        acc = y[:out_ch, :]
        s1_ref[...] += jnp.sum(acc, axis=1, keepdims=True)    # (out_ch, 1)
        s2_ref[...] += jnp.sum(acc * acc, axis=1, keepdims=True)

    # ---------- phase 1: BatchNorm + FiLM + PReLU + residual ---------------
    @pl.when(phase == 1)
    def _():
        inv_nl = 1.0 / float(n * l_out)
        mean = s1_ref[...] * inv_nl                           # (out_ch, 1)
        var = jnp.maximum(s2_ref[...] * inv_nl - mean * mean, 0.0)
        rstd = jax.lax.rsqrt(var + eps)                       # EUP slot

        # FiLM adaptor; select this batch's column with an iota mask + lane
        # reduce (no selector matmul, no dynamic lane slice).
        ba = par_ref[:, 0:1]                                  # (2*out_ch, 1)
        gb_all = jnp.dot(wa_ref[...], pT_ref[...],
                         preferred_element_type=jnp.float32) + ba   # (2*out_ch, N)
        lane_id = jax.lax.broadcasted_iota(jnp.int32, gb_all.shape, 1)
        gb = jnp.sum(jnp.where(lane_id == b, gb_all, 0.0),
                     axis=1, keepdims=True)                   # (2*out_ch, 1)
        g = gb[:out_ch, :]
        bb = gb[out_ch:, :]
        alpha = par_ref[:out_ch, 1:2]                         # (out_ch, 1)

        y = conv_ref[b]                                       # (2*out_ch, LANE)
        acc = y[:out_ch, :]
        res = y[out_ch:, :]

        z = (acc - mean) * rstd * g + bb                      # BN + FiLM
        z = jnp.where(z > 0, z, alpha * z)                    # PReLU
        o_ref[...] = (z + res).astype(o_ref.dtype)


# ------------------------------- wrapper ------------------------------------
def tcn_block_forward(x, p, w_conv1, w_adaptor, b_adaptor, alpha, w_res):
    """x: (N, in_ch, L_in) f32;  p: (N, 1, cond_dim) f32."""
    n, in_ch, l_in = x.shape
    out_ch, _, ksize = w_conv1.shape
    cond_dim = w_adaptor.shape[1]
    assert PADDING == 0   # TODO(synk): for PADDING > 0, pad x on length here.
    l_out = l_in - DILATION * (ksize - 1)
    ratio = out_ch // in_ch

    # Centre-crop offset must land on one conv tap (true for odd K, pad=0) so the
    # residual can ride in the same stacked matmul.
    start = (l_in - l_out) // 2
    assert start % DILATION == 0 and start // DILATION < ksize
    k_mid = start // DILATION

    # ---- wrapper-side layout plumbing (no compute hoisted) ----
    # Per-batch im2col: row k*in_ch + c, col l == x[b, c, k*dil + l].  The lane
    # axis is zero-padded L_out -> LANE so stores stay dense and BN sums exact.
    # TODO(synk): at production L build taps in-kernel from a haloed block
    # instead of materializing a 3x-duplicated slab through HBM.
    taps = [x[:, :, k * DILATION: k * DILATION + l_out] for k in range(ksize)]
    x_taps = jnp.concatenate(taps, axis=1)                     # (N, K*in_ch, L_out)
    x_taps = jnp.pad(x_taps, ((0, 0), (0, 0), (0, LANE - l_out)))

    # Stacked weight: [flattened conv ; residual gather] -> one MXU pass.
    wflat = jnp.transpose(w_conv1, (0, 2, 1)).reshape(out_ch, ksize * in_ch)
    rows = jnp.arange(out_ch)
    cols = k_mid * in_ch + rows // ratio
    w_res_gather = jnp.zeros((out_ch, ksize * in_ch), jnp.float32)
    w_res_gather = w_res_gather.at[rows, cols].set(w_res)
    w_stacked = jnp.concatenate([wflat, w_res_gather], axis=0)  # (2*out_ch, K*in_ch)

    pT = p.reshape(n, cond_dim).T                               # (cond_dim, N)

    # Packed per-channel params: col 0 = adaptor bias, col 1[:out_ch] = PReLU alpha.
    params = jnp.zeros((2 * out_ch, 2), jnp.float32)
    params = params.at[:, 0].set(b_adaptor)
    params = params.at[:out_ch, 1].set(alpha)

    kernel = functools.partial(_tcn_block_kernel, out_ch=out_ch, n=n,
                               l_out=l_out, eps=EPS)

    flops = int(n * 2 * (2 * out_ch) * (ksize * in_ch) * LANE   # stacked matmul
                + n * 2 * (2 * out_ch) * cond_dim * n           # FiLM adaptor
                + n * 10 * out_ch * LANE)                       # BN/FiLM/PReLU/res
    bytes_accessed = int(4 * (x_taps.size + pT.size + w_stacked.size
                              + w_adaptor.size + params.size
                              + n * out_ch * LANE))

    grid_spec = pltpu.PrefetchScalarGridSpec(
        num_scalar_prefetch=0,
        grid=(2, n),                                            # (phase, batch)
        in_specs=[
            pl.BlockSpec((None, ksize * in_ch, LANE), lambda ph, b: (b, 0, 0)),
            pl.BlockSpec((cond_dim, n), lambda ph, b: (0, 0)),
            pl.BlockSpec((2 * out_ch, ksize * in_ch), lambda ph, b: (0, 0)),
            pl.BlockSpec((2 * out_ch, cond_dim), lambda ph, b: (0, 0)),
            pl.BlockSpec((2 * out_ch, 2), lambda ph, b: (0, 0)),
        ],
        # Phase 0 never writes the output; mapping it to block 0 keeps every
        # output block visited consecutively (one clean write per block).
        out_specs=pl.BlockSpec((None, out_ch, LANE), lambda ph, b: (ph * b, 0, 0)),
        scratch_shapes=[
            pltpu.VMEM((n, 2 * out_ch, LANE), jnp.float32),     # conv + residual
            pltpu.VMEM((out_ch, 1), jnp.float32),               # sum(acc)
            pltpu.VMEM((out_ch, 1), jnp.float32),               # sum(acc^2)
        ],
    )

    out_pad = pl.pallas_call(
        kernel,
        grid_spec=grid_spec,
        out_shape=jax.ShapeDtypeStruct((n, out_ch, LANE), jnp.float32),
        compiler_params=pltpu.CompilerParams(
            dimension_semantics=("arbitrary", "arbitrary")),
        cost_estimate=pl.CostEstimate(flops=flops, transcendentals=n * out_ch,
                                      bytes_accessed=bytes_accessed),
    )(x_taps, pT, w_stacked, w_adaptor, params)

    return out_pad[:, :, :l_out]                                # (N, out_ch, L_out)


# ------------------------- pure-JAX reference -------------------------------
def tcn_block_ref(x, p, w_conv1, w_adaptor, b_adaptor, alpha, w_res):
    n, in_ch, l_in = x.shape
    out_ch = w_conv1.shape[0]
    l_out = l_in - DILATION * (KSIZE - 1)

    acc = jnp.zeros((n, out_ch, l_out), jnp.float32)
    for k in range(KSIZE):
        xs = x[:, :, k * DILATION: k * DILATION + l_out]
        acc = acc + jnp.einsum('oc,ncl->nol', w_conv1[:, :, k], xs)

    gb = p.reshape(n, -1) @ w_adaptor.T + b_adaptor
    g = gb[:, :out_ch][:, :, None]
    b = gb[:, out_ch:][:, :, None]
    mean = jnp.mean(acc, axis=(0, 2), keepdims=True)
    var = jnp.mean((acc - mean) ** 2, axis=(0, 2), keepdims=True)
    z = (acc - mean) / jnp.sqrt(var + EPS) * g + b
    z = jnp.where(z > 0, z, alpha[None, :, None] * z)

    chan_map = jnp.arange(out_ch) // (out_ch // in_ch)
    x_res = w_res[None, :, None] * x[:, chan_map, :]
    start = (l_in - l_out) // 2
    return z + x_res[:, :, start:start + l_out]


# --------------------------------- main --------------------------------------
if __name__ == "__main__":
    key = jax.random.PRNGKey(0)
    k_x, k_p, k_w1, k_wa, k_ba, k_wr = jax.random.split(key, 6)

    x = jax.random.normal(k_x, (N, IN_CH, L_IN), jnp.float32)
    p = jax.random.normal(k_p, (N, 1, COND_DIM), jnp.float32)

    # Deterministic synthetic parameters (shapes match the torch module).
    w_conv1   = 0.2 * jax.random.normal(k_w1, (OUT_CH, IN_CH, KSIZE), jnp.float32)
    w_adaptor = 0.1 * jax.random.normal(k_wa, (2 * OUT_CH, COND_DIM), jnp.float32)
    b_adaptor = 0.1 * jax.random.normal(k_ba, (2 * OUT_CH,), jnp.float32)
    alpha     = jnp.full((OUT_CH,), 0.25, jnp.float32)        # PReLU default init
    w_res     = 0.5 * jax.random.normal(k_wr, (OUT_CH,), jnp.float32)

    out = tcn_block_forward(x, p, w_conv1, w_adaptor, b_adaptor, alpha, w_res)
    out = jax.block_until_ready(out)

    ref = tcn_block_ref(x, p, w_conv1, w_adaptor, b_adaptor, alpha, w_res)
    assert out.shape == (N, OUT_CH, L_OUT), out.shape
    assert jnp.allclose(out, ref, rtol=1e-3, atol=1e-3), \
        float(jnp.max(jnp.abs(out - ref)))

    print("KERNEL_OK")
</pallas_src>

<mosaic_0001>
module attributes {stable_mosaic.version = 11 : i64} {
  func.func @_tcn_block_kernel(%arg0: i32, %arg1: i32, %arg2: memref<1x12x128xf32, #tpu.memory_space<vmem>>, %arg3: memref<32x2xf32, #tpu.memory_space<vmem>>, %arg4: memref<16x12xf32, #tpu.memory_space<vmem>>, %arg5: memref<16x32xf32, #tpu.memory_space<vmem>>, %arg6: memref<16x2xf32, #tpu.memory_space<vmem>>, %arg7: memref<1x8x128xf32, #tpu.memory_space<vmem>>, %arg8: memref<2x16x128xf32, #tpu.memory_space<vmem>>, %arg9: memref<8x1xf32, #tpu.memory_space<vmem>>, %arg10: memref<8x1xf32, #tpu.memory_space<vmem>>) attributes {dimension_semantics = [#tpu.dimension_semantics<arbitrary>, #tpu.dimension_semantics<arbitrary>], iteration_bounds = array<i64: 2, 2>, scalar_prefetch = 0 : i64, scratch_operands = 3 : i64, tpu.core_type = #tpu.core_type<tc>, window_params = [{transform_indices = @transform_0, window_bounds = array<i64: 1, 12, 128>}, {pipeline_mode = #tpu.pipeline_mode<synchronous>, transform_indices = @transform_1, window_bounds = array<i64: 32, 2>}, {pipeline_mode = #tpu.pipeline_mode<synchronous>, transform_indices = @transform_2, window_bounds = array<i64: 16, 12>}, {pipeline_mode = #tpu.pipeline_mode<synchronous>, transform_indices = @transform_3, window_bounds = array<i64: 16, 32>}, {pipeline_mode = #tpu.pipeline_mode<synchronous>, transform_indices = @transform_4, window_bounds = array<i64: 16, 2>}, {transform_indices = @transform_5, window_bounds = array<i64: 1, 8, 128>}]} {
    %c0_i32 = arith.constant 0 : i32
    %0 = arith.cmpi eq, %arg0, %c0_i32 : i32
    %1 = arith.extui %0 : i1 to i32
    %c0_i32_0 = arith.constant 0 : i32
    %2 = arith.cmpi ne, %1, %c0_i32_0 : i32
    scf.if %2 {
      %c0_i32_2 = arith.constant 0 : i32
      %6 = arith.cmpi eq, %arg1, %c0_i32_2 : i32
      %7 = arith.extui %6 : i1 to i32
      %c0_i32_3 = arith.constant 0 : i32
      %8 = arith.cmpi ne, %7, %c0_i32_3 : i32
      scf.if %8 {
        %cst_20 = arith.constant 0.000000e+00 : f32
        %29 = vector.broadcast %cst_20 : f32 to vector<8x1xf32>
        %c0_21 = arith.constant 0 : index
        %c0_22 = arith.constant 0 : index
        %30 = vector.load %arg9[%c0_21, %c0_22] : memref<8x1xf32, #tpu.memory_space<vmem>>, vector<8x1xf32>
        tpu.vector_store %arg9[%c0_21, %c0_22], %29 {strides = array<i32>} : memref<8x1xf32, #tpu.memory_space<vmem>>, vector<8x1xf32>,
        %cst_23 = arith.constant 0.000000e+00 : f32
        %31 = vector.broadcast %cst_23 : f32 to vector<8x1xf32>
        %c0_24 = arith.constant 0 : index
        %c0_25 = arith.constant 0 : index
        %32 = vector.load %arg10[%c0_24, %c0_25] : memref<8x1xf32, #tpu.memory_space<vmem>>, vector<8x1xf32>
        tpu.vector_store %arg10[%c0_24, %c0_25], %31 {strides = array<i32>} : memref<8x1xf32, #tpu.memory_space<vmem>>, vector<8x1xf32>,
      } else {
      }
      %c0 = arith.constant 0 : index
      %c0_4 = arith.constant 0 : index
      %9 = vector.load %arg4[%c0, %c0_4] : memref<16x12xf32, #tpu.memory_space<vmem>>, vector<16x12xf32>
      %c0_5 = arith.constant 0 : index
      %c0_6 = arith.constant 0 : index
      %c0_7 = arith.constant 0 : index
      %10 = vector.load %arg2[%c0_5, %c0_6, %c0_7] : memref<1x12x128xf32, #tpu.memory_space<vmem>>, vector<1x12x128xf32>
      %11 = vector.shape_cast %10 : vector<1x12x128xf32> to vector<12x128xf32>
      %cst = arith.constant dense<0.000000e+00> : vector<16x128xf32>
      %12 = tpu.matmul %9, %11, %cst {dimension_numbers = #tpu.dot_dimension_numbers<[1], [0], [0], [1], [0, 0, 1, 1], [], []>} : vector<16x12xf32>, vector<12x128xf32>, vector<16x128xf32> -> vector<16x128xf32>
      %13 = arith.index_cast %arg1 : i32 to index
      %c0_8 = arith.constant 0 : index
      %c0_9 = arith.constant 0 : index
      %14 = vector.load %arg8[%13, %c0_8, %c0_9] : memref<2x16x128xf32, #tpu.memory_space<vmem>>, vector<1x16x128xf32>
      %15 = vector.shape_cast %14 : vector<1x16x128xf32> to vector<16x128xf32>
      %16 = vector.shape_cast %12 : vector<16x128xf32> to vector<1x16x128xf32>
      tpu.vector_store %arg8[%13, %c0_8, %c0_9], %16 {strides = array<i32>} : memref<2x16x128xf32, #tpu.memory_space<vmem>>, vector<1x16x128xf32>,
      %17 = vector.extract_strided_slice %12 {offsets = [0, 0], sizes = [8, 128], strides = [1, 1]} : vector<16x128xf32> to vector<8x128xf32>
      %c0_10 = arith.constant 0 : index
      %c0_11 = arith.constant 0 : index
      %18 = vector.load %arg9[%c0_10, %c0_11] : memref<8x1xf32, #tpu.memory_space<vmem>>, vector<8x1xf32>
      %cst_12 = arith.constant dense<0.000000e+00> : vector<8xf32>
      %19 = vector.multi_reduction <add>, %17, %cst_12 [1] : vector<8x128xf32> to vector<8xf32>
      %20 = vector.shape_cast %19 : vector<8xf32> to vector<8x1xf32>
      %21 = arith.addf %18, %20 : vector<8x1xf32>
      %c0_13 = arith.constant 0 : index
      %c0_14 = arith.constant 0 : index
      %22 = vector.load %arg9[%c0_13, %c0_14] : memref<8x1xf32, #tpu.memory_space<vmem>>, vector<8x1xf32>
      tpu.vector_store %arg9[%c0_13, %c0_14], %21 {strides = array<i32>} : memref<8x1xf32, #tpu.memory_space<vmem>>, vector<8x1xf32>,
      %c0_15 = arith.constant 0 : index
      %c0_16 = arith.constant 0 : index
      %23 = vector.load %arg10[%c0_15, %c0_16] : memref<8x1xf32, #tpu.memory_space<vmem>>, vector<8x1xf32>
      %24 = arith.mulf %17, %17 : vector<8x128xf32>
      %cst_17 = arith.constant dense<0.000000e+00> : vector<8xf32>
      %25 = vector.multi_reduction <add>, %24, %cst_17 [1] : vector<8x128xf32> to vector<8xf32>
      %26 = vector.shape_cast %25 : vector<8xf32> to vector<8x1xf32>
      %27 = arith.addf %23, %26 : vector<8x1xf32>
      %c0_18 = arith.constant 0 : index
      %c0_19 = arith.constant 0 : index
      %28 = vector.load %arg10[%c0_18, %c0_19] : memref<8x1xf32, #tpu.memory_space<vmem>>, vector<8x1xf32>
      tpu.vector_store %arg10[%c0_18, %c0_19], %27 {strides = array<i32>} : memref<8x1xf32, #tpu.memory_space<vmem>>, vector<8x1xf32>,
    } else {
    }
    %c1_i32 = arith.constant 1 : i32
    %3 = arith.cmpi eq, %arg0, %c1_i32 : i32
    %4 = arith.extui %3 : i1 to i32
    %c0_i32_1 = arith.constant 0 : i32
    %5 = arith.cmpi ne, %4, %c0_i32_1 : i32
    scf.if %5 {
      %c0 = arith.constant 0 : index
      %c0_2 = arith.constant 0 : index
      %6 = vector.load %arg9[%c0, %c0_2] : memref<8x1xf32, #tpu.memory_space<vmem>>, vector<8x1xf32>
      %cst = arith.constant 0.0178571437 : f32
      %7 = vector.broadcast %cst : f32 to vector<8x1xf32>
      %8 = arith.mulf %6, %7 : vector<8x1xf32>
      %c0_3 = arith.constant 0 : index
      %c0_4 = arith.constant 0 : index
      %9 = vector.load %arg10[%c0_3, %c0_4] : memref<8x1xf32, #tpu.memory_space<vmem>>, vector<8x1xf32>
      %cst_5 = arith.constant 0.0178571437 : f32
      %10 = vector.broadcast %cst_5 : f32 to vector<8x1xf32>
      %11 = arith.mulf %9, %10 : vector<8x1xf32>
      %12 = arith.mulf %8, %8 : vector<8x1xf32>
      %13 = arith.subf %11, %12 : vector<8x1xf32>
      %cst_6 = arith.constant 0.000000e+00 : f32
      %14 = vector.broadcast %cst_6 : f32 to vector<8x1xf32>
      %15 = arith.maximumf %13, %14 : vector<8x1xf32>
      %cst_7 = arith.constant 9.99999974E-6 : f32
      %16 = vector.broadcast %cst_7 : f32 to vector<8x1xf32>
      %17 = arith.addf %15, %16 : vector<8x1xf32>
      %18 = math.rsqrt %17 : vector<8x1xf32>
      %c0_8 = arith.constant 0 : index
      %c0_9 = arith.constant 0 : index
      %19 = vector.load %arg6[%c0_8, %c0_9] : memref<16x2xf32, #tpu.memory_space<vmem>>, vector<16x1xf32>
      %c0_10 = arith.constant 0 : index
      %c0_11 = arith.constant 0 : index
      %20 = vector.load %arg5[%c0_10, %c0_11] : memref<16x32xf32, #tpu.memory_space<vmem>>, vector<16x32xf32>
      %c0_12 = arith.constant 0 : index
      %c0_13 = arith.constant 0 : index
      %21 = vector.load %arg3[%c0_12, %c0_13] : memref<32x2xf32, #tpu.memory_space<vmem>>, vector<32x2xf32>
      %cst_14 = arith.constant dense<0.000000e+00> : vector<16x2xf32>
      %22 = tpu.matmul %20, %21, %cst_14 {dimension_numbers = #tpu.dot_dimension_numbers<[1], [0], [0], [1], [0, 0, 1, 1], [], []>} : vector<16x32xf32>, vector<32x2xf32>, vector<16x2xf32> -> vector<16x2xf32>
      %23 = vector.broadcast %19 : vector<16x1xf32> to vector<16x2xf32>
      %24 = arith.addf %22, %23 : vector<16x2xf32>
      %25 = tpu.iota {dimensions = array<i32: 1>} : vector<16x2xi32>
      %26 = vector.broadcast %arg1 : i32 to vector<16x2xi32>
      %27 = arith.cmpi eq, %25, %26 : vector<16x2xi32>
      %cst_15 = arith.constant 0.000000e+00 : f32
      %28 = vector.broadcast %cst_15 : f32 to vector<16x2xf32>
      %29 = arith.select %27, %24, %28 : vector<16x2xi1>, vector<16x2xf32>
      %cst_16 = arith.constant dense<0.000000e+00> : vector<16xf32>
      %30 = vector.multi_reduction <add>, %29, %cst_16 [1] : vector<16x2xf32> to vector<16xf32>
      %31 = vector.shape_cast %30 : vector<16xf32> to vector<16x1xf32>
      %32 = vector.extract_strided_slice %31 {offsets = [0, 0], sizes = [8, 1], strides = [1, 1]} : vector<16x1xf32> to vector<8x1xf32>
      %33 = vector.extract_strided_slice %31 {offsets = [8, 0], sizes = [8, 1], strides = [1, 1]} : vector<16x1xf32> to vector<8x1xf32>
      %c0_17 = arith.constant 0 : index
      %c1 = arith.constant 1 : index
      %34 = vector.load %arg6[%c0_17, %c1] : memref<16x2xf32, #tpu.memory_space<vmem>>, vector<8x1xf32>
      %35 = arith.index_cast %arg1 : i32 to index
      %c0_18 = arith.constant 0 : index
      %c0_19 = arith.constant 0 : index
      %36 = vector.load %arg8[%35, %c0_18, %c0_19] : memref<2x16x128xf32, #tpu.memory_space<vmem>>, vector<1x16x128xf32>
      %37 = vector.shape_cast %36 : vector<1x16x128xf32> to vector<16x128xf32>
      %38 = vector.extract_strided_slice %37 {offsets = [0, 0], sizes = [8, 128], strides = [1, 1]} : vector<16x128xf32> to vector<8x128xf32>
      %39 = vector.extract_strided_slice %37 {offsets = [8, 0], sizes = [8, 128], strides = [1, 1]} : vector<16x128xf32> to vector<8x128xf32>
      %40 = vector.broadcast %8 : vector<8x1xf32> to vector<8x128xf32>
      %41 = arith.subf %38, %40 : vector<8x128xf32>
      %42 = vector.broadcast %18 : vector<8x1xf32> to vector<8x128xf32>
      %43 = arith.mulf %41, %42 : vector<8x128xf32>
      %44 = vector.broadcast %32 : vector<8x1xf32> to vector<8x128xf32>
      %45 = arith.mulf %43, %44 : vector<8x128xf32>
      %46 = vector.broadcast %33 : vector<8x1xf32> to vector<8x128xf32>
      %47 = arith.addf %45, %46 : vector<8x128xf32>
      %cst_20 = arith.constant 0.000000e+00 : f32
      %48 = vector.broadcast %cst_20 : f32 to vector<8x128xf32>
      %49 = arith.cmpf ogt, %47, %48 : vector<8x128xf32>
      %50 = vector.broadcast %34 : vector<8x1xf32> to vector<8x128xf32>
      %51 = arith.mulf %50, %47 : vector<8x128xf32>
      %52 = arith.select %49, %47, %51 : vector<8x128xi1>, vector<8x128xf32>
      %53 = arith.addf %52, %39 : vector<8x128xf32>
      %c0_21 = arith.constant 0 : index
      %c0_22 = arith.constant 0 : index
      %c0_23 = arith.constant 0 : index
      %54 = vector.load %arg7[%c0_21, %c0_22, %c0_23] : memref<1x8x128xf32, #tpu.memory_space<vmem>>, vector<1x8x128xf32>
      %55 = vector.shape_cast %54 : vector<1x8x128xf32> to vector<8x128xf32>
      %56 = vector.shape_cast %53 : vector<8x128xf32> to vector<1x8x128xf32>
      tpu.vector_store %arg7[%c0_21, %c0_22, %c0_23], %56 {strides = array<i32>} : memref<1x8x128xf32, #tpu.memory_space<vmem>>, vector<1x8x128xf32>,
    } else {
    }
    return
  }
  func.func @transform_0(%arg0: i32, %arg1: i32) -> (i32, i32, i32) {
    %c0_i32 = arith.constant 0 : i32
    %c0_i32_0 = arith.constant 0 : i32
    %c0_i32_1 = arith.constant 0 : i32
    return %arg1, %c0_i32, %c0_i32_0 : i32, i32, i32
  }
  func.func @transform_1(%arg0: i32, %arg1: i32) -> (i32, i32) {
    %c0_i32 = arith.constant 0 : i32
    %c0_i32_0 = arith.constant 0 : i32
    %c0_i32_1 = arith.constant 0 : i32
    return %c0_i32, %c0_i32_0 : i32, i32
  }
  func.func @transform_2(%arg0: i32, %arg1: i32) -> (i32, i32) {
    %c0_i32 = arith.constant 0 : i32
    %c0_i32_0 = arith.constant 0 : i32
    %c0_i32_1 = arith.constant 0 : i32
    return %c0_i32, %c0_i32_0 : i32, i32
  }
  func.func @transform_3(%arg0: i32, %arg1: i32) -> (i32, i32) {
    %c0_i32 = arith.constant 0 : i32
    %c0_i32_0 = arith.constant 0 : i32
    %c0_i32_1 = arith.constant 0 : i32
    return %c0_i32, %c0_i32_0 : i32, i32
  }
  func.func @transform_4(%arg0: i32, %arg1: i32) -> (i32, i32) {
    %c0_i32 = arith.constant 0 : i32
    %c0_i32_0 = arith.constant 0 : i32
    %c0_i32_1 = arith.constant 0 : i32
    return %c0_i32, %c0_i32_0 : i32, i32
  }
  func.func @transform_5(%arg0: i32, %arg1: i32) -> (i32, i32, i32) {
    %0 = arith.muli %arg0, %arg1 : i32
    %c0_i32 = arith.constant 0 : i32
    %c0_i32_0 = arith.constant 0 : i32
    %c0_i32_1 = arith.constant 0 : i32
    return %0, %c0_i32, %c0_i32_0 : i32, i32, i32
  }
}

</mosaic_0001>

<llo_original>
// kernel: tpu_custom_call.1
$region0: #{tpu_custom_call.1}
  #allocation0 [shape = 'u32[]', space=smem, size = 0x4, offset = 0x4, fixed_abs, tag = 'smem constant byte address 0x4 - core index']
  #allocation1 [shape = 'u32[144,128]{1,0:T(1,128)}', space=vmem, size = 0x12000, scoped, tag = 'internal scratch']
  #allocation2 [shape = 'f32[2,16,128]{2,1,0:T(8,128)}', space=vmem, size = 0x4000, scoped, tag = 'scratch operand']
  #allocation3 [shape = 'f32[8,1]{1,0:T(8,128)}', space=vmem, size = 0x1000, scoped, tag = 'scratch operand']
  #allocation4 [shape = 'f32[8,1]{1,0:T(8,128)}', space=vmem, size = 0x1000, scoped, tag = 'scratch operand']
  %s0 = inlined_call_operand.vmem [shape: f32[2,12,128], index: 0, kind: input, shape index: {}]
  %s1 = inlined_call_operand.vmem [shape: f32[32,2], index: 1, kind: input, shape index: {}]
  %s2 = inlined_call_operand.vmem [shape: f32[16,12], index: 2, kind: input, shape index: {}]
  %s3 = inlined_call_operand.vmem [shape: f32[16,32], index: 3, kind: input, shape index: {}]
  %s4 = inlined_call_operand.vmem [shape: f32[16,2], index: 4, kind: input, shape index: {}]
  %s5 = inlined_call_operand.hbm [shape: f32[2,8,128], index: 5, kind: output, shape index: {}]
  %s6 = sld [smem:[#allocation0]]
  $region65: #{tpu_custom_call.1} parent=0
    _
  %s8 = ssub.s32 1, %s6
  %s9 = scalar_select 0, %s8, %s6
  $region1: #{tpu_custom_call.1} parent=0
    #allocation5 [shape = 'u8[8192]{0}', space=vmem, size = 0x2000, scoped, tag = 'output window, operand 0']
    #allocation6 [shape = 's32[2]{0}', space=sflag, size = 0x8, scoped, tag = 'scoped memory for tpu_custom_call.1']
    %10 = vsyncpa [#allocation6], 0
    %s11 = scalar_lea.sflag [#allocation6], 1
    %12 = vsyncpa %s11, 0
    loop: start=0, step=1, limit=6
    $region2: #{tpu_custom_call.1} parent=1 // loop_pre_header
      _
    $region3: #{tpu_custom_call.1} parent=1 // loop_header
      %s14 = sphi 0, %s18
      %p15 = scmp.ge.s32.totalorder %s14, 6
      %s21 = sphi 0, %s33
      %s22 = sphi 0, %s29
      %s23 = sphi 0, %s21
      %s24 = sphi 0, %s22
      %s25 = sphi 0, %s23
      %s26 = sphi 0, %s24
      %s36 = sphi 0, %s38
      %s39 = sphi 0, %s36
      %s40 = sphi 0, %s39
      %s56 = sphi 0, %s40
      %s60 = sphi 0, %s60
      %s62 = sphi 0, %s60
      %s63 = sphi 0, %s62
      %s77 = sphi 0, %s63
      %s81 = sphi 0, %s81
      %s83 = sphi 0, %s81
      %s84 = sphi 0, %s83
      %s98 = sphi 0, %s84
      %s102 = sphi 0, %s102
      %s104 = sphi 0, %s102
      %s105 = sphi 0, %s104
      %s119 = sphi 0, %s105
      %s123 = sphi 0, %s123
      %s125 = sphi 0, %s123
      %s126 = sphi 0, %s125
      %s140 = sphi 0, %s126
      %s148 = sphi 0, %s150
      %s151 = sphi 0, %s148
      %s152 = sphi 0, %s151
      %s168 = sphi 0, %s152
    $region4: #{tpu_custom_call.1} parent=1 // loop_header_branch
      %17 = sbr.rel (%p15) target = $region8
    $region5: #{tpu_custom_call.1} parent=1 // loop_body
      %s19 = ssub.s32 %s14, 1
      %s20 = ssub.s32 %s14, 2
      %s27 = sadd.s32 1, %s22
      %p28 = scmp.ge.s32.totalorder %s27, 2
      %s29 = scalar_select %p28, 0, %s27
      %s30 = sadd.s32 1, %s21
      %s31 = scalar_select %p28, %s30, %s21
      %p32 = scmp.ge.s32.totalorder %s31, 2
      %s33 = scalar_select %p32, 0, %s31
      %s34 = ssub.s32 %s22, %s29
      %p35 = scmp.eq.s32.totalorder %s34, 0
      %s37 = sadd.s32 %s36, 1
      %s38 = scalar_select %p35, %s36, %s37
      %p41 = pneg %p35
      %p42 = scmp.eq.s32.totalorder %s14, 3
      %p43 = por %p41, %p42
      %p44 = scmp.ne.s32.totalorder %s36, %s39
      %p45 = scmp.eq.s32.totalorder %s14, 0
      %p46 = por %p44, %p45
      %p47 = scmp.ne.s32.totalorder %s36, %s39
      %p48 = scmp.eq.s32.totalorder %s19, 3
      %p49 = por %p47, %p48
      %p50 = scmp.ne.s32.totalorder %s39, %s40
      %p51 = scmp.eq.s32.totalorder %s19, 0
      %p52 = por %p50, %p51
      %p53 = scmp.ne.s32.totalorder %s39, %s40
      %p54 = scmp.eq.s32.totalorder %s20, 3
      %p55 = por %p53, %p54
      %p57 = scmp.ne.s32.totalorder %s40, %s56
      %p58 = scmp.eq.s32.totalorder %s20, 0
      %p59 = por %p57, %p58
      %s61 = sadd.s32 %s60, 1
      %p64 = scmp.eq.s32.totalorder %s14, 3
      %p65 = scmp.ne.s32.totalorder %s60, %s62
      %p66 = scmp.eq.s32.totalorder %s14, 0
      %p67 = por %p65, %p66
      %p68 = scmp.ne.s32.totalorder %s60, %s62
      %p69 = scmp.eq.s32.totalorder %s19, 3
      %p70 = por %p68, %p69
      %p71 = scmp.ne.s32.totalorder %s62, %s63
      %p72 = scmp.eq.s32.totalorder %s19, 0
      %p73 = por %p71, %p72
      %p74 = scmp.ne.s32.totalorder %s62, %s63
      %p75 = scmp.eq.s32.totalorder %s20, 3
      %p76 = por %p74, %p75
      %p78 = scmp.ne.s32.totalorder %s63, %s77
      %p79 = scmp.eq.s32.totalorder %s20, 0
      %p80 = por %p78, %p79
      %s82 = sadd.s32 %s81, 1
      %p85 = scmp.eq.s32.totalorder %s14, 3
      %p86 = scmp.ne.s32.totalorder %s81, %s83
      %p87 = scmp.eq.s32.totalorder %s14, 0
      %p88 = por %p86, %p87
      %p89 = scmp.ne.s32.totalorder %s81, %s83
      %p90 = scmp.eq.s32.totalorder %s19, 3
      %p91 = por %p89, %p90
      %p92 = scmp.ne.s32.totalorder %s83, %s84
      %p93 = scmp.eq.s32.totalorder %s19, 0
      %p94 = por %p92, %p93
      %p95 = scmp.ne.s32.totalorder %s83, %s84
      %p96 = scmp.eq.s32.totalorder %s20, 3
      %p97 = por %p95, %p96
      %p99 = scmp.ne.s32.totalorder %s84, %s98
      %p100 = scmp.eq.s32.totalorder %s20, 0
      %p101 = por %p99, %p100
      %s103 = sadd.s32 %s102, 1
      %p106 = scmp.eq.s32.totalorder %s14, 3
      %p107 = scmp.ne.s32.totalorder %s102, %s104
      %p108 = scmp.eq.s32.totalorder %s14, 0
      %p109 = por %p107, %p108
      %p110 = scmp.ne.s32.totalorder %s102, %s104
      %p111 = scmp.eq.s32.totalorder %s19, 3
      %p112 = por %p110, %p111
      %p113 = scmp.ne.s32.totalorder %s104, %s105
      %p114 = scmp.eq.s32.totalorder %s19, 0
      %p115 = por %p113, %p114
      %p116 = scmp.ne.s32.totalorder %s104, %s105
      %p117 = scmp.eq.s32.totalorder %s20, 3
      %p118 = por %p116, %p117
      %p120 = scmp.ne.s32.totalorder %s105, %s119
      %p121 = scmp.eq.s32.totalorder %s20, 0
      %p122 = por %p120, %p121
      %s124 = sadd.s32 %s123, 1
      %p127 = scmp.eq.s32.totalorder %s14, 3
      %p128 = scmp.ne.s32.totalorder %s123, %s125
      %p129 = scmp.eq.s32.totalorder %s14, 0
      %p130 = por %p128, %p129
      %p131 = scmp.ne.s32.totalorder %s123, %s125
      %p132 = scmp.eq.s32.totalorder %s19, 3
      %p133 = por %p131, %p132
      %p134 = scmp.ne.s32.totalorder %s125, %s126
      %p135 = scmp.eq.s32.totalorder %s19, 0
      %p136 = por %p134, %p135
      %p137 = scmp.ne.s32.totalorder %s125, %s126
      %p138 = scmp.eq.s32.totalorder %s20, 3
      %p139 = por %p137, %p138
      %p141 = scmp.ne.s32.totalorder %s126, %s140
      %p142 = scmp.eq.s32.totalorder %s20, 0
      %p143 = por %p141, %p142
      %s144 = smul.u32 %s21, %s22
      %s145 = smul.u32 %s33, %s29
      %s146 = ssub.s32 %s144, %s145
      %p147 = scmp.eq.s32.totalorder %s146, 0
      %s149 = sadd.s32 %s148, 1
      %s150 = scalar_select %p147, %s148, %s149
      %p153 = pneg %p147
      %p154 = scmp.eq.s32.totalorder %s14, 3
      %p155 = por %p153, %p154
      %p156 = scmp.ne.s32.totalorder %s148, %s151
      %p157 = scmp.eq.s32.totalorder %s14, 0
      %p158 = por %p156, %p157
      %p159 = scmp.ne.s32.totalorder %s148, %s151
      %p160 = scmp.eq.s32.totalorder %s19, 3
      %p161 = por %p159, %p160
      %p162 = scmp.ne.s32.totalorder %s151, %s152
      %p163 = scmp.eq.s32.totalorder %s19, 0
      %p164 = por %p162, %p163
      %p165 = scmp.ne.s32.totalorder %s151, %s152
      %p166 = scmp.eq.s32.totalorder %s20, 3
      %p167 = por %p165, %p166
      %p169 = scmp.ne.s32.totalorder %s152, %s168
      %p170 = scmp.eq.s32.totalorder %s20, 0
      %p171 = por %p169, %p170
      %p172 = scmp.le.s32.totalorder 1, %s14
      %p173 = scmp.lt.s32.totalorder %s14, 5
      %p174 = pnand %p172, %p173
      %p175 = pneg %p174
      // Predicated region
      $region9: #{tpu_custom_call.1} parent=5 // pred_check
        _
      $region10: #{tpu_custom_call.1} parent=5 // pred_check_branch
        %177 = sbr.rel (%p174) target = $region12
      $region11: #{tpu_custom_call.1} parent=5 // pred_region
        %s178 = ssub.s32 %s14, 1
        // Predicated region
        $region13: #{tpu_custom_call.1} parent=11 // pred_check
          %p179 = pneg %p73
        $region14: #{tpu_custom_call.1} parent=11 // pred_check_branch
          %181 = sbr.rel (%p179) target = $region16
        $region15: #{tpu_custom_call.1} parent=11 // pred_region
          _
        $region16: #{tpu_custom_call.1} parent=11 // pred_fallthru
          _
        // Predicated region
        $region17: #{tpu_custom_call.1} parent=11 // pred_check
          %p182 = pneg %p94
        $region18: #{tpu_custom_call.1} parent=11 // pred_check_branch
          %184 = sbr.rel (%p182) target = $region20
        $region19: #{tpu_custom_call.1} parent=11 // pred_region
          _
        $region20: #{tpu_custom_call.1} parent=11 // pred_fallthru
          _
        // Predicated region
        $region21: #{tpu_custom_call.1} parent=11 // pred_check
          %p185 = pneg %p115
        $region22: #{tpu_custom_call.1} parent=11 // pred_check_branch
          %187 = sbr.rel (%p185) target = $region24
        $region23: #{tpu_custom_call.1} parent=11 // pred_region
          _
        $region24: #{tpu_custom_call.1} parent=11 // pred_fallthru
          _
        // Predicated region
        $region25: #{tpu_custom_call.1} parent=11 // pred_check
          %p188 = pneg %p136
        $region26: #{tpu_custom_call.1} parent=11 // pred_check_branch
          %190 = sbr.rel (%p188) target = $region28
        $region27: #{tpu_custom_call.1} parent=11 // pred_region
          _
        $region28: #{tpu_custom_call.1} parent=11 // pred_fallthru
          _
      $region12: #{tpu_custom_call.1} parent=5 // pred_fallthru
        _
      %p191 = scmp.lt.s32.totalorder %s14, 4
      // Predicated region
      $region29: #{tpu_custom_call.1} parent=5 // pred_check
        %p192 = pneg %p191
      $region30: #{tpu_custom_call.1} parent=5 // pred_check_branch
        %194 = sbr.rel (%p192) target = $region32
      $region31: #{tpu_custom_call.1} parent=5 // pred_region
        // Predicated region
        $region33: #{tpu_custom_call.1} parent=31 // pred_check
          %p195 = pneg %p46
        $region34: #{tpu_custom_call.1} parent=31 // pred_check_branch
          %197 = sbr.rel (%p195) target = $region36
        $region35: #{tpu_custom_call.1} parent=31 // pred_region
          %p198 = scmp.lt.s32.totalorder %s22, 1
          %s199 = scalar_select %p198, %s22, 1
          %s200 = smul.addr %s199, 2
          %s201 = smul.addr %s200, 8
          %s202 = scalar_lea.vmem %s0, %s201
        $region36: #{tpu_custom_call.1} parent=31 // pred_fallthru
          _
      $region32: #{tpu_custom_call.1} parent=5 // pred_fallthru
        _
      %p203 = scmp.le.s32.totalorder 1, %s14
      %p204 = scmp.lt.s32.totalorder %s14, 5
      %p205 = pnand %p203, %p204
      %p206 = pneg %p205
      // Predicated region
      $region37: #{tpu_custom_call.1} parent=5 // pred_check
        _
      $region38: #{tpu_custom_call.1} parent=5 // pred_check_branch
        %208 = sbr.rel (%p205) target = $region40
      $region39: #{tpu_custom_call.1} parent=5 // pred_region
        %s209 = ssub.s32 %s14, 1
        %p210 = scmp.lt.s32.totalorder %s24, 1
        %s211 = scalar_select %p210, %s24, 1
        %s212 = smul.addr %s211, 2
        %s213 = smul.addr %s212, 8
        %s214 = scalar_lea.vmem %s0, %s213
        %p215 = pneg %p52
        %p216 = pneg %p49
        %p217 = pneg %p73
        %p218 = pneg %p70
        %p219 = pneg %p94
        %p220 = pneg %p91
        %p221 = pneg %p115
        %p222 = pneg %p112
        %p223 = pneg %p136
        %p224 = pneg %p133
        %p225 = pneg %p164
        %p226 = pneg %p161
        %s227 = sand.u32 %s151, 1
        %s228 = scalar_lea.sflag [#allocation6], %s227
        %s229 = sand.u32 %s151, 1
        %s230 = smul.addr %s229, 8
        %s231 = scalar_lea.vmem [#allocation5], %s230
        %p232 = scmp.lt.s32.totalorder %s24, 1
        %s233 = scalar_select %p232, %s24, 1
        %s234 = smul.addr %s233, 2
        %s235 = smul.addr %s234, 8
        %s236 = scalar_lea.vmem %s0, %s235
        %s237 = smul.u32 %s23, %s24
        %p238 = scmp.eq.s32.totalorder %s23, 0
        // Predicated region
        $region41: #{tpu_custom_call.1} parent=39 // pred_check
          %p239 = pneg %p238
        $region42: #{tpu_custom_call.1} parent=39 // pred_check_branch
          %241 = sbr.rel (%p239) target = $region44
        $region43: #{tpu_custom_call.1} parent=39 // pred_region
          %p242 = scmp.eq.s32.totalorder %s24, 0
          // Predicated region
          $region45: #{tpu_custom_call.1} parent=43 // pred_check
            %p243 = pneg %p242
          $region46: #{tpu_custom_call.1} parent=43 // pred_check_branch
            %245 = sbr.rel (%p243) target = $region48
          $region47: #{tpu_custom_call.1} parent=43 // pred_region
            %vm246 = vcmask 7168
            %247 = vst.msk [vmem:[#allocation3] sm:$0xff] %vm246, 0.0
            %248 = vst.msk [vmem:[#allocation4] sm:$0xff] %vm246, 0.0
          $region48: #{tpu_custom_call.1} parent=43 // pred_fallthru
            _
          %v249 = vld [vmem:[%s2] sm:$0xff]
          %v250 = vld [vmem:[%s2 + $0x8] sm:$0xff]
          %v251 = vld [vmem:[%s236] sm:$0xff]
          %v252 = vld [vmem:[%s236 + $0x8] sm:$0xf]
          %vm253 = vcmask 97280
          %v255 = vsel %vm253, %v249, 0
          %v258 = vsel %vm253, %v250, 0
          %vm260 = vcmask 1043456
          %v262 = vsel %vm260, %v252, 0
          %264 = vmatprep.subr.mxu0 0.0
          %265 = vmatpush1.msra.mxu0 0.0
          %266 = vmatprep.subr.mxu0 0.0
          %267 = vmatpush1.msra.mxu0 0.0
          %268 = vmatprep.subr.mxu0 0.0
          %269 = vmatpush1.msra.mxu0 0.0
          %270 = vmatprep.subr.mxu0 0.0
          %271 = vmatpush1.msra.mxu0 0.0
          %272 = vmatprep.subr.mxu0 0.0
          %273 = vmatpush1.msra.mxu0 0.0
          %274 = vmatprep.subr.mxu0 0.0
          %275 = vmatpush1.msra.mxu0 0.0
          %276 = vmatprep.subr.mxu0 0.0
          %277 = vmatpush1.msra.mxu0 0.0
          %278 = vmatprep.subr.mxu0 0.0
          %279 = vmatpush1.msra.mxu0 0.0
          %280 = vmatprep.subr.mxu0 0.0
          %281 = vmatpush1.msra.mxu0 0.0
          %282 = vmatprep.subr.mxu0 0.0
          %283 = vmatpush1.msra.mxu0 0.0
          %284 = vmatprep.subr.mxu0 0.0
          %285 = vmatpush1.msra.mxu0 0.0
          %286 = vmatprep.subr.mxu0 0.0
          %287 = vmatpush1.msra.mxu0 0.0
          %288 = vmatprep.subr.mxu0 0.0
          %289 = vmatpush1.msra.mxu0 0.0
          %290 = vmatprep.subr.mxu0 0.0
          %291 = vmatpush1.msra.mxu0 0.0
          %292 = vmatprep.subr.mxu0 0.0
          %293 = vmatpush1.msra.mxu0 %v262
          %294 = vmatprep.subr.mxu0 0.0
          %295 = vmatpush1.msra.mxu0 %v251
          %296 = vmatprep.subr.mxu0 0.0
          %297 = vmatpush2.msra.mxu0 0.0
          %298 = vmatprep.subr.mxu0 0.0
          %299 = vmatpush2.msra.mxu0 0.0
          %300 = vmatprep.subr.mxu0 0.0
          %301 = vmatpush2.msra.mxu0 0.0
          %302 = vmatprep.subr.mxu0 0.0
          %303 = vmatpush2.msra.mxu0 0.0
          %304 = vmatprep.subr.mxu0 0.0
          %305 = vmatpush2.msra.mxu0 0.0
          %306 = vmatprep.subr.mxu0 0.0
          %307 = vmatpush2.msra.mxu0 0.0
          %308 = vmatprep.subr.mxu0 0.0
          %309 = vmatpush2.msra.mxu0 0.0
          %310 = vmatprep.subr.mxu0 0.0
          %311 = vmatpush2.msra.mxu0 0.0
          %312 = vmatprep.subr.mxu0 0.0
          %313 = vmatpush2.msra.mxu0 0.0
          %314 = vmatprep.subr.mxu0 0.0
          %315 = vmatpush2.msra.mxu0 0.0
          %316 = vmatprep.subr.mxu0 0.0
          %317 = vmatpush2.msra.mxu0 0.0
          %318 = vmatprep.subr.mxu0 0.0
          %319 = vmatpush2.msra.mxu0 0.0
          %320 = vmatprep.subr.mxu0 0.0
          %321 = vmatpush2.msra.mxu0 0.0
          %322 = vmatprep.subr.mxu0 0.0
          %323 = vmatpush2.msra.mxu0 0.0
          %324 = vmatprep.subr.mxu0 0.0
          %325 = vmatpush2.msra.mxu0 0.0
          %326 = vmatprep.subr.mxu0 0.0
          %327 = vmatpush2.msra.mxu0 0.0
          %328 = vmatprep.mubr.f32.mxu0 0.0
          %329 = vmatmul.mubr.f32.gmra.mxu0 %v255
          %v330 = vpop.f32.mrf.mxu0
          %v331 = vadd.f32 0.0, %v330
          %v332 = vpop.f32.mrf.mxu0
          %333 = vmatprep.mubr.f32.mxu0 0.0
          %334 = vmatmul.mubr.f32.gmra.mxu0 %v258
          %v335 = vpop.f32.mrf.mxu0
          %v336 = vadd.f32 0.0, %v335
          %v337 = vpop.f32.mrf.mxu0
          %338 = vdwg.mxu0
          %s339 = smul.u32 %s24, 16
          %s340 = scalar_lea.vmem [#allocation2], %s339
          %341 = vst [vmem:[%s340] sm:$0xff] %v331
          %342 = vst [vmem:[%s340 + $0x8] sm:$0xff] %v336
          %v343 = vld [vmem:[#allocation3] sm:$0xff]
          %344 = vadd.xlane.f32.xlu0 %v331
          %v345 = vpop.xlane.xlu0 %344
          %v346 = vadd.f32 %v343, %v345
          %vm347 = vcmask 7168
          %348 = vst.msk [vmem:[#allocation3] sm:$0xff] %vm347, %v346
          %v349 = vld [vmem:[#allocation4] sm:$0xff]
          %v350 = vmul.f32 %v331, %v331
          %351 = vadd.xlane.f32.xlu0 %v350
          %v352 = vpop.xlane.xlu0 %351
          %v353 = vadd.f32 %v349, %v352
          %354 = vst.msk [vmem:[#allocation4] sm:$0xff] %vm347, %v353
        $region44: #{tpu_custom_call.1} parent=39 // pred_fallthru
          _
        %p355 = scmp.eq.s32.totalorder %s23, 1
        // Predicated region
        $region49: #{tpu_custom_call.1} parent=39 // pred_check
          %p356 = pneg %p355
        $region50: #{tpu_custom_call.1} parent=39 // pred_check_branch
          %358 = sbr.rel (%p356) target = $region52
        $region51: #{tpu_custom_call.1} parent=39 // pred_region
          %v359 = vld [vmem:[#allocation3] sm:$0xff]
          %v360 = vmul.f32 %v359, 0.017857144
          %v361 = vld [vmem:[#allocation4] sm:$0xff]
          %v362 = vmul.f32 %v361, 0.017857144
          %v363 = vmul.f32 %v360, %v360
          %v364 = vsub.f32 %v362, %v363
          %v365 = vmax.f32 %v364, 0.0
          %v366 = vadd.f32 %v365, 1e-05
          %v367 = vrsqrt.pop %v366
          %v368 = vld [vmem:[%s4] sm:$0xff]
          %v369 = vld [vmem:[%s4 + $0x8] sm:$0xff]
          %v370 = vld [vmem:[%s3] sm:$0xff]
          %v371 = vld [vmem:[%s3 + $0x8] sm:$0xff]
          %v372 = vld [vmem:[%s1] sm:$0xff]
          %v373 = vld [vmem:[%s1 + $0x8] sm:$0xff]
          %v374 = vld [vmem:[%s1 + $0x10] sm:$0xff]
          %v375 = vld [vmem:[%s1 + $0x18] sm:$0xff]
          %377 = vset.pattern.permute.xlu0 0
          %378 = vperm.xlu0 %377, %v368
          %v379 = vpop.permute.xlu0 %378
          %382 = vset.pattern.permute.xlu0 0
          %383 = vperm.xlu0 %382, %v369
          %v384 = vpop.permute.xlu0 %383
          %vm386 = vcmask 261120
          %v388 = vsel %vm386, %v370, 0
          %v391 = vsel %vm386, %v371, 0
          %393 = vmatprep.subr.mxu0 0.0
          %394 = vmatpush1.msra.mxu0 0.0
          %395 = vmatprep.subr.mxu0 0.0
          %396 = vmatpush1.msra.mxu0 0.0
          %397 = vmatprep.subr.mxu0 0.0
          %398 = vmatpush1.msra.mxu0 0.0
          %399 = vmatprep.subr.mxu0 0.0
          %400 = vmatpush1.msra.mxu0 0.0
          %401 = vmatprep.subr.mxu0 0.0
          %402 = vmatpush1.msra.mxu0 0.0
          %403 = vmatprep.subr.mxu0 0.0
          %404 = vmatpush1.msra.mxu0 0.0
          %405 = vmatprep.subr.mxu0 0.0
          %406 = vmatpush1.msra.mxu0 0.0
          %407 = vmatprep.subr.mxu0 0.0
          %408 = vmatpush1.msra.mxu0 0.0
          %409 = vmatprep.subr.mxu0 0.0
          %410 = vmatpush1.msra.mxu0 0.0
          %411 = vmatprep.subr.mxu0 0.0
          %412 = vmatpush1.msra.mxu0 0.0
          %413 = vmatprep.subr.mxu0 0.0
          %414 = vmatpush1.msra.mxu0 0.0
          %415 = vmatprep.subr.mxu0 0.0
          %416 = vmatpush1.msra.mxu0 0.0
          %417 = vmatprep.subr.mxu0 0.0
          %418 = vmatpush1.msra.mxu0 %v375
          %419 = vmatprep.subr.mxu0 0.0
          %420 = vmatpush1.msra.mxu0 %v374
          %421 = vmatprep.subr.mxu0 0.0
          %422 = vmatpush1.msra.mxu0 %v373
          %423 = vmatprep.subr.mxu0 0.0
          %424 = vmatpush1.msra.mxu0 %v372
          %425 = vmatprep.subr.mxu0 0.0
          %426 = vmatpush2.msra.mxu0 0.0
          %427 = vmatprep.subr.mxu0 0.0
          %428 = vmatpush2.msra.mxu0 0.0
          %429 = vmatprep.subr.mxu0 0.0
          %430 = vmatpush2.msra.mxu0 0.0
          %431 = vmatprep.subr.mxu0 0.0
          %432 = vmatpush2.msra.mxu0 0.0
          %433 = vmatprep.subr.mxu0 0.0
          %434 = vmatpush2.msra.mxu0 0.0
          %435 = vmatprep.subr.mxu0 0.0
          %436 = vmatpush2.msra.mxu0 0.0
          %437 = vmatprep.subr.mxu0 0.0
          %438 = vmatpush2.msra.mxu0 0.0
          %439 = vmatprep.subr.mxu0 0.0
          %440 = vmatpush2.msra.mxu0 0.0
          %441 = vmatprep.subr.mxu0 0.0
          %442 = vmatpush2.msra.mxu0 0.0
          %443 = vmatprep.subr.mxu0 0.0
          %444 = vmatpush2.msra.mxu0 0.0
          %445 = vmatprep.subr.mxu0 0.0
          %446 = vmatpush2.msra.mxu0 0.0
          %447 = vmatprep.subr.mxu0 0.0
          %448 = vmatpush2.msra.mxu0 0.0
          %449 = vmatprep.subr.mxu0 0.0
          %450 = vmatpush2.msra.mxu0 0.0
          %451 = vmatprep.subr.mxu0 0.0
          %452 = vmatpush2.msra.mxu0 0.0
          %453 = vmatprep.subr.mxu0 0.0
          %454 = vmatpush2.msra.mxu0 0.0
          %455 = vmatprep.subr.mxu0 0.0
          %456 = vmatpush2.msra.mxu0 0.0
          %457 = vmatprep.mubr.f32.mxu0 0.0
          %458 = vmatmul.mubr.f32.gmra.mxu0 %v388
          %v459 = vpop.f32.mrf.mxu0
          %v460 = vadd.f32 %v379, %v459
          %v461 = vpop.f32.mrf.mxu0
          %462 = vmatprep.mubr.f32.mxu0 0.0
          %463 = vmatmul.mubr.f32.gmra.mxu0 %v391
          %v464 = vpop.f32.mrf.mxu0
          %v465 = vadd.f32 %v384, %v464
          %v466 = vpop.f32.mrf.mxu0
          %467 = vdwg.mxu0
          %v468 = vlaneseq
          %v469 = vand.u32 %v468, 127
          %v470 = vstv %s24
          %vm471 = vcmp.eq.s32.totalorder %v469, %v470
          %v472 = vsel %vm471, %v460, 0.0
          %v473 = vsel %vm471, %v465, 0.0
          %vm474 = vcmask 15360
          %v475 = vsel %vm474, %v472, 0.0
          %476 = vadd.xlane.f32.xlu0 %v475
          %v477 = vpop.xlane.xlu0 %476
          %v478 = vsel %vm474, %v473, 0.0
          %479 = vadd.xlane.f32.xlu0 %v478
          %v480 = vpop.xlane.xlu0 %479
          %v481 = vld [vmem:[%s4] sm:$0xff]
          %s482 = smul.u32 %s24, 16
          %s483 = scalar_lea.vmem [#allocation2], %s482
          %v484 = vld [vmem:[%s483] sm:$0xff]
          %v485 = vld [vmem:[%s483 + $0x8] sm:$0xff]
          %487 = vset.pattern.permute.xlu0 0
          %488 = vperm.xlu0 %487, %v360
          %v489 = vpop.permute.xlu0 %488
          %v491 = vsub.f32 %v484, %v489
          %493 = vset.pattern.permute.xlu0 0
          %494 = vperm.xlu0 %493, %v367
          %v495 = vpop.permute.xlu0 %494
          %v497 = vmul.f32 %v491, %v495
          %v498 = vmul.f32 %v497, %v477
          %v499 = vadd.f32 %v498, %v480
          %vm500 = vcmp.gt.f32.partialorder %v499, 0.0
          %502 = vset.pattern.permute.xlu0 1
          %503 = vperm.xlu0 %502, %v481
          %v504 = vpop.permute.xlu0 %503
          %v506 = vmul.f32 %v504, %v499
          %v507 = vsel %vm500, %v499, %v506
          %v508 = vadd.f32 %v507, %v485
          %509 = vst [vmem:[%s231] sm:$0xff] %v508
        $region52: #{tpu_custom_call.1} parent=39 // pred_fallthru
          _
        %s510 = sand.u32 %s151, 1
        %s511 = scalar_lea.sflag [#allocation6], %s510
        %s512 = sand.u32 %s151, 1
        %s513 = smul.addr %s512, 8
        %s514 = scalar_lea.vmem [#allocation5], %s513
        // Predicated region
        $region53: #{tpu_custom_call.1} parent=39 // pred_check
          %p515 = pneg %p161
        $region54: #{tpu_custom_call.1} parent=39 // pred_check_branch
          %517 = sbr.rel (%p515) target = $region56
        $region55: #{tpu_custom_call.1} parent=39 // pred_region
          %s518 = smul.u32 %s23, %s24
          %s520 = ssub.s32 128, 128
          %521 = vsyncadd %s511, %s520
          %s522 = smul.addr %s518, 128
          %s523 = scalar_lea.hbm %s5, %s522
          %s525 = sshll.u32 %s514, 4
          %s526 = int_to_ptr.vmem [resolvable:$true] %s525
          %528 = dma.vmem_to_hbm [thread:$0]  %s526, 128, %s523, %s511
        $region56: #{tpu_custom_call.1} parent=39 // pred_fallthru
          _
      $region40: #{tpu_custom_call.1} parent=5 // pred_fallthru
        _
      %p529 = scmp.le.s32.totalorder 2, %s14
      // Predicated region
      $region57: #{tpu_custom_call.1} parent=5 // pred_check
        %p530 = pneg %p529
      $region58: #{tpu_custom_call.1} parent=5 // pred_check_branch
        %532 = sbr.rel (%p530) target = $region60
      $region59: #{tpu_custom_call.1} parent=5 // pred_region
        %s533 = ssub.s32 %s14, 2
        // Predicated region
        $region61: #{tpu_custom_call.1} parent=59 // pred_check
          %p534 = pneg %p167
        $region62: #{tpu_custom_call.1} parent=59 // pred_check_branch
          %536 = sbr.rel (%p534) target = $region64
        $region63: #{tpu_custom_call.1} parent=59 // pred_region
          %s537 = sand.u32 %s152, 1
          %s538 = scalar_lea.sflag [#allocation6], %s537
          %s539 = sand.u32 %s152, 1
          %s540 = smul.addr %s539, 8
          %s541 = scalar_lea.vmem [#allocation5], %s540
          %542 = dma.done %s538, 128
        $region64: #{tpu_custom_call.1} parent=59 // pred_fallthru
          _
      $region60: #{tpu_custom_call.1} parent=5 // pred_fallthru
        _
    $region6: #{tpu_custom_call.1} parent=1 // loop_footer
      %s18 = sadd.s32 1, %s14
    $region7: #{tpu_custom_call.1} parent=1 // loop_footer_branch
      %13 = sbr.rel target = $region3
    $region8: #{tpu_custom_call.1} parent=1 // loop_exit
      _
    %543 = vsyncpa [#allocation6], 1
    %s544 = scalar_lea.sflag [#allocation6], 1
    %545 = vsyncpa %s544, 1

</llo_original>
